<compile_context>
chip_gen: v7x
topology: tpu7x:2x2x1
jax: 0.10.0
libtpu: 0.0.40
codegen_flags: <defaults>
</compile_context>

<pallas_src>
import math
import functools

import jax
import jax.numpy as jnp
from jax.experimental import pallas as pl
from jax.experimental.pallas import tpu as pltpu

D_K = D_V = 64  # module-level constants from the PyTorch spec


# ---------------------------------------------------------------------------
# Kernel: one (batch*head) group, one tile of queries.
# ---------------------------------------------------------------------------
def _sdpa_kernel(q_ref, k_ref, v_ref, ctx_ref, attn_ref, *, scale):
    q = q_ref[0].astype(jnp.float32)          # (bq, d_k)
    k = k_ref[0].astype(jnp.float32)          # (Lk, d_k)
    v = v_ref[0].astype(jnp.float32)          # (Lk, d_v)

    # scores = Q @ K^T * (1/sqrt(D_K))   -> MXU
    scores = jax.lax.dot_general(
        q, k,
        dimension_numbers=(((1,), (1,)), ((), ())),
        preferred_element_type=jnp.float32,
    ) * scale                                  # (bq, Lk)

    # TODO(synk): the reference's masked_fill is a non-in-place no-op, so no
    # masking is applied here (matches the PyTorch module's actual output).

    # numerically stable softmax along the key axis
    m = jnp.max(scores, axis=-1, keepdims=True)
    e = jnp.exp(scores - m)
    attn = e / jnp.sum(e, axis=-1, keepdims=True)     # (bq, Lk)

    attn_ref[0] = attn.astype(attn_ref.dtype)

    # context = attn @ V  -> MXU
    ctx = jnp.dot(attn, v, preferred_element_type=jnp.float32)  # (bq, d_v)
    ctx_ref[0] = ctx.astype(ctx_ref.dtype)


# ---------------------------------------------------------------------------
# Wrapper
# ---------------------------------------------------------------------------
def scaled_dot_product_attention(Q, K, V, attn_mask=None, *, block_q=128):
    """Q: (B,H,Lq,d_k)  K: (B,H,Lk,d_k)  V: (B,H,Lk,d_v)  attn_mask: ignored
    (mirrors the PyTorch module, whose masked_fill has no effect).
    Returns (context (B,H,Lq,d_v), attn (B,H,Lq,Lk))."""
    del attn_mask  # faithful to the reference: no effect on the output

    B, H, Lq, dk = Q.shape
    Lk = K.shape[2]
    dv = V.shape[3]
    scale = 1.0 / math.sqrt(D_K)  # module divides by sqrt(D_K), not sqrt(dk)

    # collapse (B, H) -> one grid axis; keeps index maps simple
    q3 = Q.reshape(B * H, Lq, dk)
    k3 = K.reshape(B * H, Lk, dk)
    v3 = V.reshape(B * H, Lk, dv)

    bq = min(block_q, Lq)
    grid = (B * H, pl.cdiv(Lq, bq))

    kernel = functools.partial(_sdpa_kernel, scale=scale)

    itemsize = Q.dtype.itemsize
    flops = 2 * B * H * Lq * Lk * (dk + dv) + 5 * B * H * Lq * Lk
    bytes_accessed = itemsize * (
        q3.size + k3.size + v3.size + B * H * Lq * Lk + B * H * Lq * dv
    )

    ctx, attn = pl.pallas_call(
        kernel,
        out_shape=(
            jax.ShapeDtypeStruct((B * H, Lq, dv), Q.dtype),   # context
            jax.ShapeDtypeStruct((B * H, Lq, Lk), Q.dtype),   # attn
        ),
        grid=grid,
        in_specs=[
            pl.BlockSpec((1, bq, dk), lambda g, i: (g, i, 0)),   # Q tile
            pl.BlockSpec((1, Lk, dk), lambda g, i: (g, 0, 0)),   # K (resident per g)
            pl.BlockSpec((1, Lk, dv), lambda g, i: (g, 0, 0)),   # V (resident per g)
        ],
        out_specs=(
            pl.BlockSpec((1, bq, dv), lambda g, i: (g, i, 0)),   # context tile
            pl.BlockSpec((1, bq, Lk), lambda g, i: (g, i, 0)),   # attn tile (lane-dense)
        ),
        compiler_params=pltpu.CompilerParams(
            dimension_semantics=("parallel", "parallel"),
            vmem_limit_bytes=64 * 1024 * 1024,
        ),
        cost_estimate=pl.CostEstimate(
            flops=flops,
            transcendentals=B * H * Lq * Lk,
            bytes_accessed=bytes_accessed,
        ),
    )(q3, k3, v3)

    return ctx.reshape(B, H, Lq, dv), attn.reshape(B, H, Lq, Lk)


# ---------------------------------------------------------------------------
# Pure-JAX reference (identical semantics to the PyTorch module's forward)
# ---------------------------------------------------------------------------
def _reference_sdpa(Q, K, V, attn_mask):
    scores = jnp.einsum("bhqd,bhkd->bhqk", Q, K) / math.sqrt(D_K)
    # masked_fill in the reference is not in-place -> no effect
    del attn_mask
    attn = jax.nn.softmax(scores, axis=-1)
    context = jnp.einsum("bhqk,bhkd->bhqd", attn, V)
    return context, attn


if __name__ == "__main__":
    # Small shapes consistent with the module: d_k = d_v = 64, len multiple of 128.
    B, H, L = 2, 2, 128
    key = jax.random.PRNGKey(0)
    kq, kk, kv = jax.random.split(key, 3)
    Q = jax.random.normal(kq, (B, H, L, D_K), dtype=jnp.float32)
    K = jax.random.normal(kk, (B, H, L, D_K), dtype=jnp.float32)
    V = jax.random.normal(kv, (B, H, L, D_V), dtype=jnp.float32)
    # causal-style boolean mask (has no effect, same as the PyTorch module)
    attn_mask = jnp.triu(jnp.ones((L, L), dtype=bool), k=1)[None, None].repeat(B, 0).repeat(H, 1)

    context, attn = scaled_dot_product_attention(Q, K, V, attn_mask)
    jax.block_until_ready((context, attn))

    ctx_ref, attn_ref = _reference_sdpa(Q, K, V, attn_mask)

    assert context.shape == (B, H, L, D_V)
    assert attn.shape == (B, H, L, L)
    assert jnp.allclose(attn, attn_ref, atol=2e-3, rtol=2e-3), "attn mismatch vs reference"
    assert jnp.allclose(context, ctx_ref, atol=2e-3, rtol=2e-3), "context mismatch vs reference"
    # softmax rows sum to 1
    assert jnp.allclose(jnp.sum(attn, axis=-1), 1.0, atol=1e-4)

    print("KERNEL_OK")
</pallas_src>

<mosaic_0001>
module attributes {stable_mosaic.version = 11 : i64} {
  func.func @_sdpa_kernel(%arg0: i32, %arg1: i32, %arg2: memref<1x128x64xf32, #tpu.memory_space<vmem>>, %arg3: memref<1x128x64xf32, #tpu.memory_space<vmem>>, %arg4: memref<1x128x64xf32, #tpu.memory_space<vmem>>, %arg5: memref<1x128x64xf32, #tpu.memory_space<vmem>>, %arg6: memref<1x128x128xf32, #tpu.memory_space<vmem>>) attributes {dimension_semantics = [#tpu.dimension_semantics<parallel>, #tpu.dimension_semantics<parallel>], iteration_bounds = array<i64: 4, 1>, scalar_prefetch = 0 : i64, scratch_operands = 0 : i64, tpu.core_type = #tpu.core_type<tc>, window_params = [{transform_indices = @transform_0, window_bounds = array<i64: 1, 128, 64>}, {transform_indices = @transform_1, window_bounds = array<i64: 1, 128, 64>}, {transform_indices = @transform_2, window_bounds = array<i64: 1, 128, 64>}, {transform_indices = @transform_3, window_bounds = array<i64: 1, 128, 64>}, {transform_indices = @transform_4, window_bounds = array<i64: 1, 128, 128>}]} {
    %c0 = arith.constant 0 : index
    %c0_0 = arith.constant 0 : index
    %c0_1 = arith.constant 0 : index
    %0 = vector.load %arg2[%c0, %c0_0, %c0_1] : memref<1x128x64xf32, #tpu.memory_space<vmem>>, vector<1x128x64xf32>
    %1 = vector.shape_cast %0 : vector<1x128x64xf32> to vector<128x64xf32>
    %c0_2 = arith.constant 0 : index
    %c0_3 = arith.constant 0 : index
    %c0_4 = arith.constant 0 : index
    %2 = vector.load %arg3[%c0_2, %c0_3, %c0_4] : memref<1x128x64xf32, #tpu.memory_space<vmem>>, vector<1x128x64xf32>
    %3 = vector.shape_cast %2 : vector<1x128x64xf32> to vector<128x64xf32>
    %c0_5 = arith.constant 0 : index
    %c0_6 = arith.constant 0 : index
    %c0_7 = arith.constant 0 : index
    %4 = vector.load %arg4[%c0_5, %c0_6, %c0_7] : memref<1x128x64xf32, #tpu.memory_space<vmem>>, vector<1x128x64xf32>
    %5 = vector.shape_cast %4 : vector<1x128x64xf32> to vector<128x64xf32>
    %cst = arith.constant dense<0.000000e+00> : vector<128x128xf32>
    %6 = tpu.matmul %1, %3, %cst {dimension_numbers = #tpu.dot_dimension_numbers<[1], [1], [0], [0], [0, 0, 1, 0], [], []>} : vector<128x64xf32>, vector<128x64xf32>, vector<128x128xf32> -> vector<128x128xf32>
    %cst_8 = arith.constant 1.250000e-01 : f32
    %7 = vector.broadcast %cst_8 : f32 to vector<128x128xf32>
    %8 = arith.mulf %6, %7 : vector<128x128xf32>
    %cst_9 = arith.constant dense<0xFF800000> : vector<128xf32>
    %9 = vector.multi_reduction <maximumf>, %8, %cst_9 [1] : vector<128x128xf32> to vector<128xf32>
    %10 = vector.shape_cast %9 : vector<128xf32> to vector<128x1xf32>
    %11 = vector.broadcast %10 : vector<128x1xf32> to vector<128x128xf32>
    %12 = arith.subf %8, %11 : vector<128x128xf32>
    %13 = math.exp %12 : vector<128x128xf32>
    %cst_10 = arith.constant dense<0.000000e+00> : vector<128xf32>
    %14 = vector.multi_reduction <add>, %13, %cst_10 [1] : vector<128x128xf32> to vector<128xf32>
    %15 = vector.shape_cast %14 : vector<128xf32> to vector<128x1xf32>
    %16 = vector.broadcast %15 : vector<128x1xf32> to vector<128x128xf32>
    %17 = arith.divf %13, %16 : vector<128x128xf32>
    %c0_11 = arith.constant 0 : index
    %c0_12 = arith.constant 0 : index
    %c0_13 = arith.constant 0 : index
    %18 = vector.load %arg6[%c0_11, %c0_12, %c0_13] : memref<1x128x128xf32, #tpu.memory_space<vmem>>, vector<1x128x128xf32>
    %19 = vector.shape_cast %18 : vector<1x128x128xf32> to vector<128x128xf32>
    %20 = vector.shape_cast %17 : vector<128x128xf32> to vector<1x128x128xf32>
    tpu.vector_store %arg6[%c0_11, %c0_12, %c0_13], %20 {strides = array<i32>} : memref<1x128x128xf32, #tpu.memory_space<vmem>>, vector<1x128x128xf32>,
    %cst_14 = arith.constant dense<0.000000e+00> : vector<128x64xf32>
    %21 = tpu.matmul %17, %5, %cst_14 {dimension_numbers = #tpu.dot_dimension_numbers<[1], [0], [0], [1], [0, 0, 1, 1], [], []>} : vector<128x128xf32>, vector<128x64xf32>, vector<128x64xf32> -> vector<128x64xf32>
    %c0_15 = arith.constant 0 : index
    %c0_16 = arith.constant 0 : index
    %c0_17 = arith.constant 0 : index
    %22 = vector.load %arg5[%c0_15, %c0_16, %c0_17] : memref<1x128x64xf32, #tpu.memory_space<vmem>>, vector<1x128x64xf32>
    %23 = vector.shape_cast %22 : vector<1x128x64xf32> to vector<128x64xf32>
    %24 = vector.shape_cast %21 : vector<128x64xf32> to vector<1x128x64xf32>
    tpu.vector_store %arg5[%c0_15, %c0_16, %c0_17], %24 {strides = array<i32>} : memref<1x128x64xf32, #tpu.memory_space<vmem>>, vector<1x128x64xf32>,
    return
  }
  func.func @transform_0(%arg0: i32, %arg1: i32) -> (i32, i32, i32) {
    %c0_i32 = arith.constant 0 : i32
    %c0_i32_0 = arith.constant 0 : i32
    return %arg0, %arg1, %c0_i32 : i32, i32, i32
  }
  func.func @transform_1(%arg0: i32, %arg1: i32) -> (i32, i32, i32) {
    %c0_i32 = arith.constant 0 : i32
    %c0_i32_0 = arith.constant 0 : i32
    %c0_i32_1 = arith.constant 0 : i32
    return %arg0, %c0_i32, %c0_i32_0 : i32, i32, i32
  }
  func.func @transform_2(%arg0: i32, %arg1: i32) -> (i32, i32, i32) {
    %c0_i32 = arith.constant 0 : i32
    %c0_i32_0 = arith.constant 0 : i32
    %c0_i32_1 = arith.constant 0 : i32
    return %arg0, %c0_i32, %c0_i32_0 : i32, i32, i32
  }
  func.func @transform_3(%arg0: i32, %arg1: i32) -> (i32, i32, i32) {
    %c0_i32 = arith.constant 0 : i32
    %c0_i32_0 = arith.constant 0 : i32
    return %arg0, %arg1, %c0_i32 : i32, i32, i32
  }
  func.func @transform_4(%arg0: i32, %arg1: i32) -> (i32, i32, i32) {
    %c0_i32 = arith.constant 0 : i32
    %c0_i32_0 = arith.constant 0 : i32
    return %arg0, %arg1, %c0_i32 : i32, i32, i32
  }
}

</mosaic_0001>

<llo_original>
// kernel: tpu_custom_call.1
$region0: #{tpu_custom_call.1}
  #allocation0 [shape = 'u32[]', space=smem, size = 0x4, offset = 0x4, fixed_abs, tag = 'smem constant byte address 0x4 - core index']
  #allocation1 [shape = 'u32[144,128]{1,0:T(1,128)}', space=vmem, size = 0x12000, scoped, tag = 'internal scratch']
  %s0 = inlined_call_operand.hbm [shape: f32[4,128,64], index: 0, kind: input, shape index: {}]
  %s1 = inlined_call_operand.hbm [shape: f32[4,128,64], index: 1, kind: input, shape index: {}]
  %s2 = inlined_call_operand.hbm [shape: f32[4,128,64], index: 2, kind: input, shape index: {}]
  %s3 = inlined_call_operand.hbm [shape: f32[4,128,64], index: 3, kind: output, shape index: {0}]
  %s4 = inlined_call_operand.hbm [shape: f32[4,128,128], index: 4, kind: output, shape index: {1}]
  %5 = xla_tuple %s3, %s4
  %s6 = sld [smem:[#allocation0]]
  $region65: #{tpu_custom_call.1} parent=0
    _
  %s8 = ssub.s32 1, %s6
  %s9 = scalar_select 0, %s8, %s6
  $region1: #{tpu_custom_call.1} parent=0
    #allocation2 [shape = 'u8[131072]{0}', space=vmem, size = 0x20000, scoped, tag = 'input window, operand 0']
    #allocation3 [shape = 's32[2]{0}', space=sflag, size = 0x8, scoped, tag = 'scoped memory for tpu_custom_call.1']
    #allocation4 [shape = 's32[2]{0}', space=sflag, size = 0x8, scoped, tag = 'scoped memory for tpu_custom_call.1']
    #allocation5 [shape = 'u8[131072]{0}', space=vmem, size = 0x20000, scoped, tag = 'input window, operand 1']
    #allocation6 [shape = 's32[2]{0}', space=sflag, size = 0x8, scoped, tag = 'scoped memory for tpu_custom_call.1']
    #allocation7 [shape = 'u8[131072]{0}', space=vmem, size = 0x20000, scoped, tag = 'input window, operand 2']
    #allocation8 [shape = 'u8[131072]{0}', space=vmem, size = 0x20000, scoped, tag = 'output window, operand 0']
    #allocation9 [shape = 'u8[131072]{0}', space=vmem, size = 0x20000, scoped, tag = 'output window, operand 1']
    #allocation10 [shape = 's32[2]{0}', space=sflag, size = 0x8, scoped, tag = 'scoped memory for tpu_custom_call.1']
    %10 = vsyncpa [#allocation3], 0
    %s11 = scalar_lea.sflag [#allocation3], 1
    %12 = vsyncpa %s11, 0
    %13 = vsyncpa [#allocation6], 0
    %s14 = scalar_lea.sflag [#allocation6], 1
    %15 = vsyncpa %s14, 0
    %16 = vsyncpa [#allocation4], 0
    %s17 = scalar_lea.sflag [#allocation4], 1
    %18 = vsyncpa %s17, 0
    %19 = vsyncpa [#allocation10], 0
    %s20 = scalar_lea.sflag [#allocation10], 1
    %21 = vsyncpa %s20, 0
    loop: start=0, step=1, limit=6
    $region2: #{tpu_custom_call.1} parent=1 // loop_pre_header
      _
    $region3: #{tpu_custom_call.1} parent=1 // loop_header
      %s23 = sphi 0, %s27
      %p24 = scmp.ge.s32.totalorder %s23, 6
      %s30 = sphi 0, %s42
      %s31 = sphi 0, %s38
      %s32 = sphi 0, %s30
      %s33 = sphi 0, %s31
      %s34 = sphi 0, %s32
      %s35 = sphi 0, %s33
      %s47 = sphi 0, %s49
      %s50 = sphi 0, %s47
      %s51 = sphi 0, %s50
      %s67 = sphi 0, %s51
      %s73 = sphi 0, %s75
      %s76 = sphi 0, %s73
      %s77 = sphi 0, %s76
      %s93 = sphi 0, %s77
      %s99 = sphi 0, %s101
      %s102 = sphi 0, %s99
      %s103 = sphi 0, %s102
      %s119 = sphi 0, %s103
      %s127 = sphi 0, %s129
      %s130 = sphi 0, %s127
      %s131 = sphi 0, %s130
      %s147 = sphi 0, %s131
      %s155 = sphi 0, %s157
      %s158 = sphi 0, %s155
      %s159 = sphi 0, %s158
      %s175 = sphi 0, %s159
    $region4: #{tpu_custom_call.1} parent=1 // loop_header_branch
      %26 = sbr.rel (%p24) target = $region8
    $region5: #{tpu_custom_call.1} parent=1 // loop_body
      %s28 = ssub.s32 %s23, 1
      %s29 = ssub.s32 %s23, 2
      %s36 = sadd.s32 1, %s31
      %p37 = scmp.ge.s32.totalorder %s36, 1
      %s38 = scalar_select %p37, 0, %s36
      %s39 = sadd.s32 1, %s30
      %s40 = scalar_select %p37, %s39, %s30
      %p41 = scmp.ge.s32.totalorder %s40, 4
      %s42 = scalar_select %p41, 0, %s40
      %s43 = ssub.s32 %s30, %s42
      %s44 = ssub.s32 %s31, %s38
      %s45 = sor.u32 %s43, %s44
      %p46 = scmp.eq.s32.totalorder %s45, 0
      %s48 = sadd.s32 %s47, 1
      %s49 = scalar_select %p46, %s47, %s48
      %p52 = pneg %p46
      %p53 = scmp.eq.s32.totalorder %s23, 3
      %p54 = por %p52, %p53
      %p55 = scmp.ne.s32.totalorder %s47, %s50
      %p56 = scmp.eq.s32.totalorder %s23, 0
      %p57 = por %p55, %p56
      %p58 = scmp.ne.s32.totalorder %s47, %s50
      %p59 = scmp.eq.s32.totalorder %s28, 3
      %p60 = por %p58, %p59
      %p61 = scmp.ne.s32.totalorder %s50, %s51
      %p62 = scmp.eq.s32.totalorder %s28, 0
      %p63 = por %p61, %p62
      %p64 = scmp.ne.s32.totalorder %s50, %s51
      %p65 = scmp.eq.s32.totalorder %s29, 3
      %p66 = por %p64, %p65
      %p68 = scmp.ne.s32.totalorder %s51, %s67
      %p69 = scmp.eq.s32.totalorder %s29, 0
      %p70 = por %p68, %p69
      %s71 = ssub.s32 %s30, %s42
      %p72 = scmp.eq.s32.totalorder %s71, 0
      %s74 = sadd.s32 %s73, 1
      %s75 = scalar_select %p72, %s73, %s74
      %p78 = pneg %p72
      %p79 = scmp.eq.s32.totalorder %s23, 3
      %p80 = por %p78, %p79
      %p81 = scmp.ne.s32.totalorder %s73, %s76
      %p82 = scmp.eq.s32.totalorder %s23, 0
      %p83 = por %p81, %p82
      %p84 = scmp.ne.s32.totalorder %s73, %s76
      %p85 = scmp.eq.s32.totalorder %s28, 3
      %p86 = por %p84, %p85
      %p87 = scmp.ne.s32.totalorder %s76, %s77
      %p88 = scmp.eq.s32.totalorder %s28, 0
      %p89 = por %p87, %p88
      %p90 = scmp.ne.s32.totalorder %s76, %s77
      %p91 = scmp.eq.s32.totalorder %s29, 3
      %p92 = por %p90, %p91
      %p94 = scmp.ne.s32.totalorder %s77, %s93
      %p95 = scmp.eq.s32.totalorder %s29, 0
      %p96 = por %p94, %p95
      %s97 = ssub.s32 %s30, %s42
      %p98 = scmp.eq.s32.totalorder %s97, 0
      %s100 = sadd.s32 %s99, 1
      %s101 = scalar_select %p98, %s99, %s100
      %p104 = pneg %p98
      %p105 = scmp.eq.s32.totalorder %s23, 3
      %p106 = por %p104, %p105
      %p107 = scmp.ne.s32.totalorder %s99, %s102
      %p108 = scmp.eq.s32.totalorder %s23, 0
      %p109 = por %p107, %p108
      %p110 = scmp.ne.s32.totalorder %s99, %s102
      %p111 = scmp.eq.s32.totalorder %s28, 3
      %p112 = por %p110, %p111
      %p113 = scmp.ne.s32.totalorder %s102, %s103
      %p114 = scmp.eq.s32.totalorder %s28, 0
      %p115 = por %p113, %p114
      %p116 = scmp.ne.s32.totalorder %s102, %s103
      %p117 = scmp.eq.s32.totalorder %s29, 3
      %p118 = por %p116, %p117
      %p120 = scmp.ne.s32.totalorder %s103, %s119
      %p121 = scmp.eq.s32.totalorder %s29, 0
      %p122 = por %p120, %p121
      %s123 = ssub.s32 %s30, %s42
      %s124 = ssub.s32 %s31, %s38
      %s125 = sor.u32 %s123, %s124
      %p126 = scmp.eq.s32.totalorder %s125, 0
      %s128 = sadd.s32 %s127, 1
      %s129 = scalar_select %p126, %s127, %s128
      %p132 = pneg %p126
      %p133 = scmp.eq.s32.totalorder %s23, 3
      %p134 = por %p132, %p133
      %p135 = scmp.ne.s32.totalorder %s127, %s130
      %p136 = scmp.eq.s32.totalorder %s23, 0
      %p137 = por %p135, %p136
      %p138 = scmp.ne.s32.totalorder %s127, %s130
      %p139 = scmp.eq.s32.totalorder %s28, 3
      %p140 = por %p138, %p139
      %p141 = scmp.ne.s32.totalorder %s130, %s131
      %p142 = scmp.eq.s32.totalorder %s28, 0
      %p143 = por %p141, %p142
      %p144 = scmp.ne.s32.totalorder %s130, %s131
      %p145 = scmp.eq.s32.totalorder %s29, 3
      %p146 = por %p144, %p145
      %p148 = scmp.ne.s32.totalorder %s131, %s147
      %p149 = scmp.eq.s32.totalorder %s29, 0
      %p150 = por %p148, %p149
      %s151 = ssub.s32 %s30, %s42
      %s152 = ssub.s32 %s31, %s38
      %s153 = sor.u32 %s151, %s152
      %p154 = scmp.eq.s32.totalorder %s153, 0
      %s156 = sadd.s32 %s155, 1
      %s157 = scalar_select %p154, %s155, %s156
      %p160 = pneg %p154
      %p161 = scmp.eq.s32.totalorder %s23, 3
      %p162 = por %p160, %p161
      %p163 = scmp.ne.s32.totalorder %s155, %s158
      %p164 = scmp.eq.s32.totalorder %s23, 0
      %p165 = por %p163, %p164
      %p166 = scmp.ne.s32.totalorder %s155, %s158
      %p167 = scmp.eq.s32.totalorder %s28, 3
      %p168 = por %p166, %p167
      %p169 = scmp.ne.s32.totalorder %s158, %s159
      %p170 = scmp.eq.s32.totalorder %s28, 0
      %p171 = por %p169, %p170
      %p172 = scmp.ne.s32.totalorder %s158, %s159
      %p173 = scmp.eq.s32.totalorder %s29, 3
      %p174 = por %p172, %p173
      %p176 = scmp.ne.s32.totalorder %s159, %s175
      %p177 = scmp.eq.s32.totalorder %s29, 0
      %p178 = por %p176, %p177
      %p179 = scmp.le.s32.totalorder 1, %s23
      %p180 = scmp.lt.s32.totalorder %s23, 5
      %p181 = pnand %p179, %p180
      %p182 = pneg %p181
      // Predicated region
      $region9: #{tpu_custom_call.1} parent=5 // pred_check
        _
      $region10: #{tpu_custom_call.1} parent=5 // pred_check_branch
        %184 = sbr.rel (%p181) target = $region12
      $region11: #{tpu_custom_call.1} parent=5 // pred_region
        %s185 = ssub.s32 %s23, 1
      $region12: #{tpu_custom_call.1} parent=5 // pred_fallthru
        _
      %p186 = scmp.lt.s32.totalorder %s23, 4
      // Predicated region
      $region13: #{tpu_custom_call.1} parent=5 // pred_check
        %p187 = pneg %p186
      $region14: #{tpu_custom_call.1} parent=5 // pred_check_branch
        %189 = sbr.rel (%p187) target = $region16
      $region15: #{tpu_custom_call.1} parent=5 // pred_region
        // Predicated region
        $region17: #{tpu_custom_call.1} parent=15 // pred_check
          %p190 = pneg %p57
        $region18: #{tpu_custom_call.1} parent=15 // pred_check_branch
          %192 = sbr.rel (%p190) target = $region20
        $region19: #{tpu_custom_call.1} parent=15 // pred_region
          %s193 = sand.u32 %s47, 1
          %s194 = scalar_lea.sflag [#allocation3], %s193
          %s195 = sand.u32 %s47, 1
          %s196 = smul.addr %s195, 128
          %s197 = scalar_lea.vmem [#allocation2], %s196
          %s198 = smul.u32 16, %s31
          %s200 = ssub.s32 2048, 2048
          %201 = vsyncadd %s194, %s200
          %s202 = smul.addr %s30, 16
          %s203 = sadd.s32 %s198, %s202
          %s204 = smul.addr %s203, 128
          %s205 = scalar_lea.hbm %s0, %s204
          %s206 = sshll.u32 %s197, 4
          %s207 = int_to_ptr.vmem [resolvable:$true] %s206
          %212 = dma.hbm_to_vmem [thread:$0]  %s205, 2048, %s207, %s194, 128, 128, 8
        $region20: #{tpu_custom_call.1} parent=15 // pred_fallthru
          _
        // Predicated region
        $region21: #{tpu_custom_call.1} parent=15 // pred_check
          %p213 = pneg %p83
        $region22: #{tpu_custom_call.1} parent=15 // pred_check_branch
          %215 = sbr.rel (%p213) target = $region24
        $region23: #{tpu_custom_call.1} parent=15 // pred_region
          %s216 = sand.u32 %s23, 1
          %s217 = scalar_lea.sflag [#allocation6], %s216
          %s218 = sand.u32 %s73, 1
          %s219 = smul.addr %s218, 128
          %s220 = scalar_lea.vmem [#allocation5], %s219
          %s222 = ssub.s32 2048, 2048
          %223 = vsyncadd %s217, %s222
          %s224 = smul.addr %s30, 16
          %s225 = smul.addr %s224, 128
          %s226 = scalar_lea.hbm %s1, %s225
          %s227 = sshll.u32 %s220, 4
          %s228 = int_to_ptr.vmem [resolvable:$true] %s227
          %233 = dma.hbm_to_vmem [thread:$0]  %s226, 2048, %s228, %s217, 128, 128, 8
        $region24: #{tpu_custom_call.1} parent=15 // pred_fallthru
          _
        // Predicated region
        $region25: #{tpu_custom_call.1} parent=15 // pred_check
          %p234 = pneg %p109
        $region26: #{tpu_custom_call.1} parent=15 // pred_check_branch
          %236 = sbr.rel (%p234) target = $region28
        $region27: #{tpu_custom_call.1} parent=15 // pred_region
          %s237 = sand.u32 %s23, 1
          %s238 = scalar_lea.sflag [#allocation6], %s237
          %s239 = sand.u32 %s99, 1
          %s240 = smul.addr %s239, 128
          %s241 = scalar_lea.vmem [#allocation7], %s240
          %s243 = ssub.s32 2048, 2048
          %244 = vsyncadd %s238, %s243
          %s245 = smul.addr %s30, 16
          %s246 = smul.addr %s245, 128
          %s247 = scalar_lea.hbm %s2, %s246
          %s248 = sshll.u32 %s241, 4
          %s249 = int_to_ptr.vmem [resolvable:$true] %s248
          %254 = dma.hbm_to_vmem [thread:$0]  %s247, 2048, %s249, %s238, 128, 128, 8
        $region28: #{tpu_custom_call.1} parent=15 // pred_fallthru
          _
      $region16: #{tpu_custom_call.1} parent=5 // pred_fallthru
        _
      %p255 = scmp.le.s32.totalorder 1, %s23
      %p256 = scmp.lt.s32.totalorder %s23, 5
      %p257 = pnand %p255, %p256
      %p258 = pneg %p257
      // Predicated region
      $region29: #{tpu_custom_call.1} parent=5 // pred_check
        _
      $region30: #{tpu_custom_call.1} parent=5 // pred_check_branch
        %260 = sbr.rel (%p257) target = $region32
      $region31: #{tpu_custom_call.1} parent=5 // pred_region
        %s261 = ssub.s32 %s23, 1
        %s262 = sand.u32 %s50, 1
        %s263 = scalar_lea.sflag [#allocation3], %s262
        %s264 = sand.u32 %s50, 1
        %s265 = smul.addr %s264, 128
        %s266 = scalar_lea.vmem [#allocation2], %s265
        // Predicated region
        $region33: #{tpu_custom_call.1} parent=31 // pred_check
          %p267 = pneg %p63
        $region34: #{tpu_custom_call.1} parent=31 // pred_check_branch
          %269 = sbr.rel (%p267) target = $region36
        $region35: #{tpu_custom_call.1} parent=31 // pred_region
          %270 = dma.done %s263, 2048
        $region36: #{tpu_custom_call.1} parent=31 // pred_fallthru
          _
        %s271 = sand.u32 %s28, 1
        %s272 = scalar_lea.sflag [#allocation6], %s271
        %s273 = sand.u32 %s76, 1
        %s274 = smul.addr %s273, 128
        %s275 = scalar_lea.vmem [#allocation5], %s274
        // Predicated region
        $region37: #{tpu_custom_call.1} parent=31 // pred_check
          %p276 = pneg %p89
        $region38: #{tpu_custom_call.1} parent=31 // pred_check_branch
          %278 = sbr.rel (%p276) target = $region40
        $region39: #{tpu_custom_call.1} parent=31 // pred_region
          %279 = dma.done %s272, 2048
        $region40: #{tpu_custom_call.1} parent=31 // pred_fallthru
          _
        %s280 = sand.u32 %s28, 1
        %s281 = scalar_lea.sflag [#allocation6], %s280
        %s282 = sand.u32 %s102, 1
        %s283 = smul.addr %s282, 128
        %s284 = scalar_lea.vmem [#allocation7], %s283
        // Predicated region
        $region41: #{tpu_custom_call.1} parent=31 // pred_check
          %p285 = pneg %p115
        $region42: #{tpu_custom_call.1} parent=31 // pred_check_branch
          %287 = sbr.rel (%p285) target = $region44
        $region43: #{tpu_custom_call.1} parent=31 // pred_region
          %288 = dma.done %s281, 2048
        $region44: #{tpu_custom_call.1} parent=31 // pred_fallthru
          _
        %s289 = sand.u32 %s50, 1
        %s290 = scalar_lea.sflag [#allocation3], %s289
        %s291 = sand.u32 %s50, 1
        %s292 = smul.addr %s291, 128
        %s293 = scalar_lea.vmem [#allocation2], %s292
        %p294 = pneg %p63
        %p295 = pneg %p60
        %s296 = sand.u32 %s28, 1
        %s297 = scalar_lea.sflag [#allocation6], %s296
        %s298 = sand.u32 %s76, 1
        %s299 = smul.addr %s298, 128
        %s300 = scalar_lea.vmem [#allocation5], %s299
        %p301 = pneg %p89
        %p302 = pneg %p86
        %s303 = sand.u32 %s28, 1
        %s304 = scalar_lea.sflag [#allocation6], %s303
        %s305 = sand.u32 %s102, 1
        %s306 = smul.addr %s305, 128
        %s307 = scalar_lea.vmem [#allocation7], %s306
        %p308 = pneg %p115
        %p309 = pneg %p112
        %p310 = pneg %p143
        %p311 = pneg %p140
        %s312 = sand.u32 %s130, 1
        %s313 = scalar_lea.sflag [#allocation4], %s312
        %s314 = sand.u32 %s130, 1
        %s315 = smul.addr %s314, 128
        %s316 = scalar_lea.vmem [#allocation8], %s315
        %p317 = pneg %p171
        %p318 = pneg %p168
        %s319 = sand.u32 %s158, 1
        %s320 = scalar_lea.sflag [#allocation10], %s319
        %s321 = sand.u32 %s158, 1
        %s322 = smul.addr %s321, 128
        %s323 = scalar_lea.vmem [#allocation9], %s322
        %s324 = smul.u32 16, %s33
        %s325 = smul.u32 16, %s33
        %s326 = smul.u32 16, %s33
        %v327 = vld [vmem:[%s266] sm:$0xff]
        %v328 = vld [vmem:[%s266 + $0x8] sm:$0xff]
        %v329 = vld [vmem:[%s266 + $0x10] sm:$0xff]
        %v330 = vld [vmem:[%s266 + $0x18] sm:$0xff]
        %v331 = vld [vmem:[%s266 + $0x20] sm:$0xff]
        %v332 = vld [vmem:[%s266 + $0x28] sm:$0xff]
        %v333 = vld [vmem:[%s266 + $0x30] sm:$0xff]
        %v334 = vld [vmem:[%s266 + $0x38] sm:$0xff]
        %v335 = vld [vmem:[%s266 + $0x40] sm:$0xff]
        %v336 = vld [vmem:[%s266 + $0x48] sm:$0xff]
        %v337 = vld [vmem:[%s266 + $0x50] sm:$0xff]
        %v338 = vld [vmem:[%s266 + $0x58] sm:$0xff]
        %v339 = vld [vmem:[%s266 + $0x60] sm:$0xff]
        %v340 = vld [vmem:[%s266 + $0x68] sm:$0xff]
        %v341 = vld [vmem:[%s266 + $0x70] sm:$0xff]
        %v342 = vld [vmem:[%s266 + $0x78] sm:$0xff]
        %v343 = vld [vmem:[%s275] sm:$0xff]
        %v344 = vld [vmem:[%s275 + $0x8] sm:$0xff]
        %v345 = vld [vmem:[%s275 + $0x10] sm:$0xff]
        %v346 = vld [vmem:[%s275 + $0x18] sm:$0xff]
        %v347 = vld [vmem:[%s275 + $0x20] sm:$0xff]
        %v348 = vld [vmem:[%s275 + $0x28] sm:$0xff]
        %v349 = vld [vmem:[%s275 + $0x30] sm:$0xff]
        %v350 = vld [vmem:[%s275 + $0x38] sm:$0xff]
        %v351 = vld [vmem:[%s275 + $0x40] sm:$0xff]
        %v352 = vld [vmem:[%s275 + $0x48] sm:$0xff]
        %v353 = vld [vmem:[%s275 + $0x50] sm:$0xff]
        %v354 = vld [vmem:[%s275 + $0x58] sm:$0xff]
        %v355 = vld [vmem:[%s275 + $0x60] sm:$0xff]
        %v356 = vld [vmem:[%s275 + $0x68] sm:$0xff]
        %v357 = vld [vmem:[%s275 + $0x70] sm:$0xff]
        %v358 = vld [vmem:[%s275 + $0x78] sm:$0xff]
        %v359 = vld [vmem:[%s284] sm:$0xff]
        %v360 = vld [vmem:[%s284 + $0x8] sm:$0xff]
        %v361 = vld [vmem:[%s284 + $0x10] sm:$0xff]
        %v362 = vld [vmem:[%s284 + $0x18] sm:$0xff]
        %v363 = vld [vmem:[%s284 + $0x20] sm:$0xff]
        %v364 = vld [vmem:[%s284 + $0x28] sm:$0xff]
        %v365 = vld [vmem:[%s284 + $0x30] sm:$0xff]
        %v366 = vld [vmem:[%s284 + $0x38] sm:$0xff]
        %v367 = vld [vmem:[%s284 + $0x40] sm:$0xff]
        %v368 = vld [vmem:[%s284 + $0x48] sm:$0xff]
        %v369 = vld [vmem:[%s284 + $0x50] sm:$0xff]
        %v370 = vld [vmem:[%s284 + $0x58] sm:$0xff]
        %v371 = vld [vmem:[%s284 + $0x60] sm:$0xff]
        %v372 = vld [vmem:[%s284 + $0x68] sm:$0xff]
        %v373 = vld [vmem:[%s284 + $0x70] sm:$0xff]
        %v374 = vld [vmem:[%s284 + $0x78] sm:$0xff]
        %vm375 = vcmask 523264
        %v377 = vsel %vm375, %v327, 0
        %v380 = vsel %vm375, %v328, 0
        %v383 = vsel %vm375, %v329, 0
        %v386 = vsel %vm375, %v330, 0
        %v389 = vsel %vm375, %v331, 0
        %v392 = vsel %vm375, %v332, 0
        %v395 = vsel %vm375, %v333, 0
        %v398 = vsel %vm375, %v334, 0
        %v401 = vsel %vm375, %v335, 0
        %v404 = vsel %vm375, %v336, 0
        %v407 = vsel %vm375, %v337, 0
        %v410 = vsel %vm375, %v338, 0
        %v413 = vsel %vm375, %v339, 0
        %v416 = vsel %vm375, %v340, 0
        %v419 = vsel %vm375, %v341, 0
        %v422 = vsel %vm375, %v342, 0
        %v425 = vsel %vm375, %v343, 0
        %v428 = vsel %vm375, %v344, 0
        %v431 = vsel %vm375, %v345, 0
        %v434 = vsel %vm375, %v346, 0
        %v437 = vsel %vm375, %v347, 0
        %v440 = vsel %vm375, %v348, 0
        %v443 = vsel %vm375, %v349, 0
        %v446 = vsel %vm375, %v350, 0
        %v449 = vsel %vm375, %v351, 0
        %v452 = vsel %vm375, %v352, 0
        %v455 = vsel %vm375, %v353, 0
        %v458 = vsel %vm375, %v354, 0
        %v461 = vsel %vm375, %v355, 0
        %v464 = vsel %vm375, %v356, 0
        %v467 = vsel %vm375, %v357, 0
        %v470 = vsel %vm375, %v358, 0
        %472 = vmatprep.subr.mxu0 0.0
        %473 = vmatpush1.xpose.msra.mxu0 %v425
        %474 = vmatprep.subr.mxu0 0.0
        %475 = vmatpush1.xpose.msra.mxu0 %v428
        %476 = vmatprep.subr.mxu0 0.0
        %477 = vmatpush1.xpose.msra.mxu0 %v431
        %478 = vmatprep.subr.mxu0 0.0
        %479 = vmatpush1.xpose.msra.mxu0 %v434
        %480 = vmatprep.subr.mxu0 0.0
        %481 = vmatpush1.xpose.msra.mxu0 %v437
        %482 = vmatprep.subr.mxu0 0.0
        %483 = vmatpush1.xpose.msra.mxu0 %v440
        %484 = vmatprep.subr.mxu0 0.0
        %485 = vmatpush1.xpose.msra.mxu0 %v443
        %486 = vmatprep.subr.mxu0 0.0
        %487 = vmatpush1.xpose.msra.mxu0 %v446
        %488 = vmatprep.subr.mxu0 0.0
        %489 = vmatpush1.xpose.msra.mxu0 %v449
        %490 = vmatprep.subr.mxu0 0.0
        %491 = vmatpush1.xpose.msra.mxu0 %v452
        %492 = vmatprep.subr.mxu0 0.0
        %493 = vmatpush1.xpose.msra.mxu0 %v455
        %494 = vmatprep.subr.mxu0 0.0
        %495 = vmatpush1.xpose.msra.mxu0 %v458
        %496 = vmatprep.subr.mxu0 0.0
        %497 = vmatpush1.xpose.msra.mxu0 %v461
        %498 = vmatprep.subr.mxu0 0.0
        %499 = vmatpush1.xpose.msra.mxu0 %v464
        %500 = vmatprep.subr.mxu0 0.0
        %501 = vmatpush1.xpose.msra.mxu0 %v467
        %502 = vmatprep.subr.mxu0 0.0
        %503 = vmatpush1.xpose.msra.mxu0 %v470
        %504 = vmatprep.subr.mxu0 0.0
        %505 = vmatpush1.xpose.msra.mxu0 0.0
        %506 = vmatprep.subr.mxu0 0.0
        %507 = vmatpush1.xpose.msra.mxu0 0.0
        %508 = vmatprep.subr.mxu0 0.0
        %509 = vmatpush1.xpose.msra.mxu0 0.0
        %510 = vmatprep.subr.mxu0 0.0
        %511 = vmatpush1.xpose.msra.mxu0 0.0
        %512 = vmatprep.subr.mxu0 0.0
        %513 = vmatpush1.xpose.msra.mxu0 0.0
        %514 = vmatprep.subr.mxu0 0.0
        %515 = vmatpush1.xpose.msra.mxu0 0.0
        %516 = vmatprep.subr.mxu0 0.0
        %517 = vmatpush1.xpose.msra.mxu0 0.0
        %518 = vmatprep.subr.mxu0 0.0
        %519 = vmatpush1.xpose.msra.mxu0 0.0
        %520 = vmatprep.subr.mxu0 0.0
        %521 = vmatpush1.xpose.msra.mxu0 0.0
        %522 = vmatprep.subr.mxu0 0.0
        %523 = vmatpush1.xpose.msra.mxu0 0.0
        %524 = vmatprep.subr.mxu0 0.0
        %525 = vmatpush1.xpose.msra.mxu0 0.0
        %526 = vmatprep.subr.mxu0 0.0
        %527 = vmatpush1.xpose.msra.mxu0 0.0
        %528 = vmatprep.subr.mxu0 0.0
        %529 = vmatpush1.xpose.msra.mxu0 0.0
        %530 = vmatprep.subr.mxu0 0.0
        %531 = vmatpush1.xpose.msra.mxu0 0.0
        %532 = vmatprep.subr.mxu0 0.0
        %533 = vmatpush1.xpose.msra.mxu0 0.0
        %534 = vmatprep.subr.mxu0 0.0
        %535 = vmatpush1.xpose.msra.mxu0 0.0
        %536 = vmatprep.mubr.f32.mxu0 0.0
        %537 = vmatmul.mubr.f32.gmra.mrb[0].mxu0 %v377
        %v538 = vpop.f32.mrb[0].mxu0
        %v539 = vadd.f32 0.0, %v538
        %v540 = vpop.f32.mrb[0].mxu0
        %541 = vmatprep.mubr.f32.mxu0 0.0
        %542 = vmatmul.mubr.f32.gmra.mrb[0].mxu0 %v380
        %v543 = vpop.f32.mrb[0].mxu0
        %v544 = vadd.f32 0.0, %v543
        %v545 = vpop.f32.mrb[0].mxu0
        %546 = vmatprep.mubr.f32.mxu0 0.0
        %547 = vmatmul.mubr.f32.gmra.mrb[0].mxu0 %v383
        %v548 = vpop.f32.mrb[0].mxu0
        %v549 = vadd.f32 0.0, %v548
        %v550 = vpop.f32.mrb[0].mxu0
        %551 = vmatprep.mubr.f32.mxu0 0.0
        %552 = vmatmul.mubr.f32.gmra.mrb[0].mxu0 %v386
        %v553 = vpop.f32.mrb[0].mxu0
        %v554 = vadd.f32 0.0, %v553
        %v555 = vpop.f32.mrb[0].mxu0
        %556 = vmatprep.mubr.f32.mxu0 0.0
        %557 = vmatmul.mubr.f32.gmra.mrb[0].mxu0 %v389
        %v558 = vpop.f32.mrb[0].mxu0
        %v559 = vadd.f32 0.0, %v558
        %v560 = vpop.f32.mrb[0].mxu0
        %561 = vmatprep.mubr.f32.mxu0 0.0
        %562 = vmatmul.mubr.f32.gmra.mrb[0].mxu0 %v392
        %v563 = vpop.f32.mrb[0].mxu0
        %v564 = vadd.f32 0.0, %v563
        %v565 = vpop.f32.mrb[0].mxu0
        %566 = vmatprep.mubr.f32.mxu0 0.0
        %567 = vmatmul.mubr.f32.gmra.mrb[0].mxu0 %v395
        %v568 = vpop.f32.mrb[0].mxu0
        %v569 = vadd.f32 0.0, %v568
        %v570 = vpop.f32.mrb[0].mxu0
        %571 = vmatprep.mubr.f32.mxu0 0.0
        %572 = vmatmul.mubr.f32.gmra.mrb[0].mxu0 %v398
        %v573 = vpop.f32.mrb[0].mxu0
        %v574 = vadd.f32 0.0, %v573
        %v575 = vpop.f32.mrb[0].mxu0
        %576 = vmatprep.mubr.f32.mxu0 0.0
        %577 = vmatmul.mubr.f32.gmra.mrb[0].mxu0 %v401
        %v578 = vpop.f32.mrb[0].mxu0
        %v579 = vadd.f32 0.0, %v578
        %v580 = vpop.f32.mrb[0].mxu0
        %581 = vmatprep.mubr.f32.mxu0 0.0
        %582 = vmatmul.mubr.f32.gmra.mrb[0].mxu0 %v404
        %v583 = vpop.f32.mrb[0].mxu0
        %v584 = vadd.f32 0.0, %v583
        %v585 = vpop.f32.mrb[0].mxu0
        %586 = vmatprep.mubr.f32.mxu0 0.0
        %587 = vmatmul.mubr.f32.gmra.mrb[0].mxu0 %v407
        %v588 = vpop.f32.mrb[0].mxu0
        %v589 = vadd.f32 0.0, %v588
        %v590 = vpop.f32.mrb[0].mxu0
        %591 = vmatprep.mubr.f32.mxu0 0.0
        %592 = vmatmul.mubr.f32.gmra.mrb[0].mxu0 %v410
        %v593 = vpop.f32.mrb[0].mxu0
        %v594 = vadd.f32 0.0, %v593
        %v595 = vpop.f32.mrb[0].mxu0
        %596 = vmatprep.mubr.f32.mxu0 0.0
        %597 = vmatmul.mubr.f32.gmra.mrb[0].mxu0 %v413
        %v598 = vpop.f32.mrb[0].mxu0
        %v599 = vadd.f32 0.0, %v598
        %v600 = vpop.f32.mrb[0].mxu0
        %601 = vmatprep.mubr.f32.mxu0 0.0
        %602 = vmatmul.mubr.f32.gmra.mrb[0].mxu0 %v416
        %v603 = vpop.f32.mrb[0].mxu0
        %v604 = vadd.f32 0.0, %v603
        %v605 = vpop.f32.mrb[0].mxu0
        %606 = vmatprep.mubr.f32.mxu0 0.0
        %607 = vmatmul.mubr.f32.gmra.mrb[0].mxu0 %v419
        %v608 = vpop.f32.mrb[0].mxu0
        %v609 = vadd.f32 0.0, %v608
        %v610 = vpop.f32.mrb[0].mxu0
        %611 = vmatprep.mubr.f32.mxu0 0.0
        %612 = vmatmul.mubr.f32.gmra.mrb[0].mxu0 %v422
        %v613 = vpop.f32.mrb[0].mxu0
        %v614 = vadd.f32 0.0, %v613
        %v615 = vpop.f32.mrb[0].mxu0
        %616 = vdwg.mxu0
        %v617 = vmul.f32 %v539, 0.125
        %v618 = vmul.f32 %v544, 0.125
        %v619 = vmul.f32 %v549, 0.125
        %v620 = vmul.f32 %v554, 0.125
        %v621 = vmul.f32 %v559, 0.125
        %v622 = vmul.f32 %v564, 0.125
        %v623 = vmul.f32 %v569, 0.125
        %v624 = vmul.f32 %v574, 0.125
        %v625 = vmul.f32 %v579, 0.125
        %v626 = vmul.f32 %v584, 0.125
        %v627 = vmul.f32 %v589, 0.125
        %v628 = vmul.f32 %v594, 0.125
        %v629 = vmul.f32 %v599, 0.125
        %v630 = vmul.f32 %v604, 0.125
        %v631 = vmul.f32 %v609, 0.125
        %v632 = vmul.f32 %v614, 0.125
        %633 = vmax.xlane.f32.xlu0 %v617
        %v634 = vpop.xlane.xlu0 %633
        %635 = vmax.xlane.f32.xlu0 %v618
        %v636 = vpop.xlane.xlu0 %635
        %637 = vmax.xlane.f32.xlu0 %v619
        %v638 = vpop.xlane.xlu0 %637
        %639 = vmax.xlane.f32.xlu0 %v620
        %v640 = vpop.xlane.xlu0 %639
        %641 = vmax.xlane.f32.xlu0 %v621
        %v642 = vpop.xlane.xlu0 %641
        %643 = vmax.xlane.f32.xlu0 %v622
        %v644 = vpop.xlane.xlu0 %643
        %645 = vmax.xlane.f32.xlu0 %v623
        %v646 = vpop.xlane.xlu0 %645
        %647 = vmax.xlane.f32.xlu0 %v624
        %v648 = vpop.xlane.xlu0 %647
        %649 = vmax.xlane.f32.xlu0 %v625
        %v650 = vpop.xlane.xlu0 %649
        %651 = vmax.xlane.f32.xlu0 %v626
        %v652 = vpop.xlane.xlu0 %651
        %653 = vmax.xlane.f32.xlu0 %v627
        %v654 = vpop.xlane.xlu0 %653
        %655 = vmax.xlane.f32.xlu0 %v628
        %v656 = vpop.xlane.xlu0 %655
        %657 = vmax.xlane.f32.xlu0 %v629
        %v658 = vpop.xlane.xlu0 %657
        %659 = vmax.xlane.f32.xlu0 %v630
        %v660 = vpop.xlane.xlu0 %659
        %661 = vmax.xlane.f32.xlu0 %v631
        %v662 = vpop.xlane.xlu0 %661
        %663 = vmax.xlane.f32.xlu0 %v632
        %v664 = vpop.xlane.xlu0 %663
        %v665 = vsub.f32 %v617, %v634
        %v666 = vsub.f32 %v618, %v636
        %v667 = vsub.f32 %v619, %v638
        %v668 = vsub.f32 %v620, %v640
        %v669 = vsub.f32 %v621, %v642
        %v670 = vsub.f32 %v622, %v644
        %v671 = vsub.f32 %v623, %v646
        %v672 = vsub.f32 %v624, %v648
        %v673 = vsub.f32 %v625, %v650
        %v674 = vsub.f32 %v626, %v652
        %v675 = vsub.f32 %v627, %v654
        %v676 = vsub.f32 %v628, %v656
        %v677 = vsub.f32 %v629, %v658
        %v678 = vsub.f32 %v630, %v660
        %v679 = vsub.f32 %v631, %v662
        %v680 = vsub.f32 %v632, %v664
        %v681 = vmul.f32 %v665, 1.442695
        %v682 = vpow.pop %v681
        %v683 = vmul.f32 %v666, 1.442695
        %v684 = vpow.pop %v683
        %v685 = vmul.f32 %v667, 1.442695
        %v686 = vpow.pop %v685
        %v687 = vmul.f32 %v668, 1.442695
        %v688 = vpow.pop %v687
        %v689 = vmul.f32 %v669, 1.442695
        %v690 = vpow.pop %v689
        %v691 = vmul.f32 %v670, 1.442695
        %v692 = vpow.pop %v691
        %v693 = vmul.f32 %v671, 1.442695
        %v694 = vpow.pop %v693
        %v695 = vmul.f32 %v672, 1.442695
        %v696 = vpow.pop %v695
        %v697 = vmul.f32 %v673, 1.442695
        %v698 = vpow.pop %v697
        %v699 = vmul.f32 %v674, 1.442695
        %v700 = vpow.pop %v699
        %v701 = vmul.f32 %v675, 1.442695
        %v702 = vpow.pop %v701
        %v703 = vmul.f32 %v676, 1.442695
        %v704 = vpow.pop %v703
        %v705 = vmul.f32 %v677, 1.442695
        %v706 = vpow.pop %v705
        %v707 = vmul.f32 %v678, 1.442695
        %v708 = vpow.pop %v707
        %v709 = vmul.f32 %v679, 1.442695
        %v710 = vpow.pop %v709
        %v711 = vmul.f32 %v680, 1.442695
        %v712 = vpow.pop %v711
        %713 = vadd.xlane.f32.xlu0 %v682
        %v714 = vpop.xlane.xlu0 %713
        %715 = vadd.xlane.f32.xlu0 %v684
        %v716 = vpop.xlane.xlu0 %715
        %717 = vadd.xlane.f32.xlu0 %v686
        %v718 = vpop.xlane.xlu0 %717
        %719 = vadd.xlane.f32.xlu0 %v688
        %v720 = vpop.xlane.xlu0 %719
        %721 = vadd.xlane.f32.xlu0 %v690
        %v722 = vpop.xlane.xlu0 %721
        %723 = vadd.xlane.f32.xlu0 %v692
        %v724 = vpop.xlane.xlu0 %723
        %725 = vadd.xlane.f32.xlu0 %v694
        %v726 = vpop.xlane.xlu0 %725
        %727 = vadd.xlane.f32.xlu0 %v696
        %v728 = vpop.xlane.xlu0 %727
        %729 = vadd.xlane.f32.xlu0 %v698
        %v730 = vpop.xlane.xlu0 %729
        %731 = vadd.xlane.f32.xlu0 %v700
        %v732 = vpop.xlane.xlu0 %731
        %733 = vadd.xlane.f32.xlu0 %v702
        %v734 = vpop.xlane.xlu0 %733
        %735 = vadd.xlane.f32.xlu0 %v704
        %v736 = vpop.xlane.xlu0 %735
        %737 = vadd.xlane.f32.xlu0 %v706
        %v738 = vpop.xlane.xlu0 %737
        %739 = vadd.xlane.f32.xlu0 %v708
        %v740 = vpop.xlane.xlu0 %739
        %741 = vadd.xlane.f32.xlu0 %v710
        %v742 = vpop.xlane.xlu0 %741
        %743 = vadd.xlane.f32.xlu0 %v712
        %v744 = vpop.xlane.xlu0 %743
        %v745 = vrcp.pop %v714
        %v746 = vmul.f32 %v682, %v745
        %v747 = vrcp.pop %v716
        %v748 = vmul.f32 %v684, %v747
        %v749 = vrcp.pop %v718
        %v750 = vmul.f32 %v686, %v749
        %v751 = vrcp.pop %v720
        %v752 = vmul.f32 %v688, %v751
        %v753 = vrcp.pop %v722
        %v754 = vmul.f32 %v690, %v753
        %v755 = vrcp.pop %v724
        %v756 = vmul.f32 %v692, %v755
        %v757 = vrcp.pop %v726
        %v758 = vmul.f32 %v694, %v757
        %v759 = vrcp.pop %v728
        %v760 = vmul.f32 %v696, %v759
        %v761 = vrcp.pop %v730
        %v762 = vmul.f32 %v698, %v761
        %v763 = vrcp.pop %v732
        %v764 = vmul.f32 %v700, %v763
        %v765 = vrcp.pop %v734
        %v766 = vmul.f32 %v702, %v765
        %v767 = vrcp.pop %v736
        %v768 = vmul.f32 %v704, %v767
        %v769 = vrcp.pop %v738
        %v770 = vmul.f32 %v706, %v769
        %v771 = vrcp.pop %v740
        %v772 = vmul.f32 %v708, %v771
        %v773 = vrcp.pop %v742
        %v774 = vmul.f32 %v710, %v773
        %v775 = vrcp.pop %v744
        %v776 = vmul.f32 %v712, %v775
        %777 = vst [vmem:[%s323] sm:$0xff] %v746
        %778 = vst [vmem:[%s323 + $0x8] sm:$0xff] %v748
        %779 = vst [vmem:[%s323 + $0x10] sm:$0xff] %v750
        %780 = vst [vmem:[%s323 + $0x18] sm:$0xff] %v752
        %781 = vst [vmem:[%s323 + $0x20] sm:$0xff] %v754
        %782 = vst [vmem:[%s323 + $0x28] sm:$0xff] %v756
        %783 = vst [vmem:[%s323 + $0x30] sm:$0xff] %v758
        %784 = vst [vmem:[%s323 + $0x38] sm:$0xff] %v760
        %785 = vst [vmem:[%s323 + $0x40] sm:$0xff] %v762
        %786 = vst [vmem:[%s323 + $0x48] sm:$0xff] %v764
        %787 = vst [vmem:[%s323 + $0x50] sm:$0xff] %v766
        %788 = vst [vmem:[%s323 + $0x58] sm:$0xff] %v768
        %789 = vst [vmem:[%s323 + $0x60] sm:$0xff] %v770
        %790 = vst [vmem:[%s323 + $0x68] sm:$0xff] %v772
        %791 = vst [vmem:[%s323 + $0x70] sm:$0xff] %v774
        %792 = vst [vmem:[%s323 + $0x78] sm:$0xff] %v776
        %793 = vmatprep.subr.mxu0 0.0
        %794 = vmatpush1.msra.mxu0 %v359
        %795 = vmatprep.subr.mxu0 0.0
        %796 = vmatpush1.msra.mxu0 %v360
        %797 = vmatprep.subr.mxu0 0.0
        %798 = vmatpush1.msra.mxu0 %v361
        %799 = vmatprep.subr.mxu0 0.0
        %800 = vmatpush1.msra.mxu0 %v362
        %801 = vmatprep.subr.mxu0 0.0
        %802 = vmatpush1.msra.mxu0 %v363
        %803 = vmatprep.subr.mxu0 0.0
        %804 = vmatpush1.msra.mxu0 %v364
        %805 = vmatprep.subr.mxu0 0.0
        %806 = vmatpush1.msra.mxu0 %v365
        %807 = vmatprep.subr.mxu0 0.0
        %808 = vmatpush1.msra.mxu0 %v366
        %809 = vmatprep.subr.mxu0 0.0
        %810 = vmatpush1.msra.mxu0 %v367
        %811 = vmatprep.subr.mxu0 0.0
        %812 = vmatpush1.msra.mxu0 %v368
        %813 = vmatprep.subr.mxu0 0.0
        %814 = vmatpush1.msra.mxu0 %v369
        %815 = vmatprep.subr.mxu0 0.0
        %816 = vmatpush1.msra.mxu0 %v370
        %817 = vmatprep.subr.mxu0 0.0
        %818 = vmatpush1.msra.mxu0 %v371
        %819 = vmatprep.subr.mxu0 0.0
        %820 = vmatpush1.msra.mxu0 %v372
        %821 = vmatprep.subr.mxu0 0.0
        %822 = vmatpush1.msra.mxu0 %v373
        %823 = vmatprep.subr.mxu0 0.0
        %824 = vmatpush1.msra.mxu0 %v374
        %825 = vmatprep.subr.mxu0 0.0
        %826 = vmatpush1.msra.mxu0 0.0
        %827 = vmatprep.subr.mxu0 0.0
        %828 = vmatpush1.msra.mxu0 0.0
        %829 = vmatprep.subr.mxu0 0.0
        %830 = vmatpush1.msra.mxu0 0.0
        %831 = vmatprep.subr.mxu0 0.0
        %832 = vmatpush1.msra.mxu0 0.0
        %833 = vmatprep.subr.mxu0 0.0
        %834 = vmatpush1.msra.mxu0 0.0
        %835 = vmatprep.subr.mxu0 0.0
        %836 = vmatpush1.msra.mxu0 0.0
        %837 = vmatprep.subr.mxu0 0.0
        %838 = vmatpush1.msra.mxu0 0.0
        %839 = vmatprep.subr.mxu0 0.0
        %840 = vmatpush1.msra.mxu0 0.0
        %841 = vmatprep.subr.mxu0 0.0
        %842 = vmatpush1.msra.mxu0 0.0
        %843 = vmatprep.subr.mxu0 0.0
        %844 = vmatpush1.msra.mxu0 0.0
        %845 = vmatprep.subr.mxu0 0.0
        %846 = vmatpush1.msra.mxu0 0.0
        %847 = vmatprep.subr.mxu0 0.0
        %848 = vmatpush1.msra.mxu0 0.0
        %849 = vmatprep.subr.mxu0 0.0
        %850 = vmatpush1.msra.mxu0 0.0
        %851 = vmatprep.subr.mxu0 0.0
        %852 = vmatpush1.msra.mxu0 0.0
        %853 = vmatprep.subr.mxu0 0.0
        %854 = vmatpush1.msra.mxu0 0.0
        %855 = vmatprep.subr.mxu0 0.0
        %856 = vmatpush1.msra.mxu0 0.0
        %857 = vmatprep.mubr.f32.mxu0 0.0
        %858 = vmatmul.mubr.f32.gmra.mrb[0].mxu0 %v746
        %v859 = vpop.f32.mrb[0].mxu0
        %v860 = vadd.f32 0.0, %v859
        %v861 = vpop.f32.mrb[0].mxu0
        %862 = vmatprep.mubr.f32.mxu0 0.0
        %863 = vmatmul.mubr.f32.gmra.mrb[0].mxu0 %v748
        %v864 = vpop.f32.mrb[0].mxu0
        %v865 = vadd.f32 0.0, %v864
        %v866 = vpop.f32.mrb[0].mxu0
        %867 = vmatprep.mubr.f32.mxu0 0.0
        %868 = vmatmul.mubr.f32.gmra.mrb[0].mxu0 %v750
        %v869 = vpop.f32.mrb[0].mxu0
        %v870 = vadd.f32 0.0, %v869
        %v871 = vpop.f32.mrb[0].mxu0
        %872 = vmatprep.mubr.f32.mxu0 0.0
        %873 = vmatmul.mubr.f32.gmra.mrb[0].mxu0 %v752
        %v874 = vpop.f32.mrb[0].mxu0
        %v875 = vadd.f32 0.0, %v874
        %v876 = vpop.f32.mrb[0].mxu0
        %877 = vmatprep.mubr.f32.mxu0 0.0
        %878 = vmatmul.mubr.f32.gmra.mrb[0].mxu0 %v754
        %v879 = vpop.f32.mrb[0].mxu0
        %v880 = vadd.f32 0.0, %v879
        %v881 = vpop.f32.mrb[0].mxu0
        %882 = vmatprep.mubr.f32.mxu0 0.0
        %883 = vmatmul.mubr.f32.gmra.mrb[0].mxu0 %v756
        %v884 = vpop.f32.mrb[0].mxu0
        %v885 = vadd.f32 0.0, %v884
        %v886 = vpop.f32.mrb[0].mxu0
        %887 = vmatprep.mubr.f32.mxu0 0.0
        %888 = vmatmul.mubr.f32.gmra.mrb[0].mxu0 %v758
        %v889 = vpop.f32.mrb[0].mxu0
        %v890 = vadd.f32 0.0, %v889
        %v891 = vpop.f32.mrb[0].mxu0
        %892 = vmatprep.mubr.f32.mxu0 0.0
        %893 = vmatmul.mubr.f32.gmra.mrb[0].mxu0 %v760
        %v894 = vpop.f32.mrb[0].mxu0
        %v895 = vadd.f32 0.0, %v894
        %v896 = vpop.f32.mrb[0].mxu0
        %897 = vmatprep.mubr.f32.mxu0 0.0
        %898 = vmatmul.mubr.f32.gmra.mrb[0].mxu0 %v762
        %v899 = vpop.f32.mrb[0].mxu0
        %v900 = vadd.f32 0.0, %v899
        %v901 = vpop.f32.mrb[0].mxu0
        %902 = vmatprep.mubr.f32.mxu0 0.0
        %903 = vmatmul.mubr.f32.gmra.mrb[0].mxu0 %v764
        %v904 = vpop.f32.mrb[0].mxu0
        %v905 = vadd.f32 0.0, %v904
        %v906 = vpop.f32.mrb[0].mxu0
        %907 = vmatprep.mubr.f32.mxu0 0.0
        %908 = vmatmul.mubr.f32.gmra.mrb[0].mxu0 %v766
        %v909 = vpop.f32.mrb[0].mxu0
        %v910 = vadd.f32 0.0, %v909
        %v911 = vpop.f32.mrb[0].mxu0
        %912 = vmatprep.mubr.f32.mxu0 0.0
        %913 = vmatmul.mubr.f32.gmra.mrb[0].mxu0 %v768
        %v914 = vpop.f32.mrb[0].mxu0
        %v915 = vadd.f32 0.0, %v914
        %v916 = vpop.f32.mrb[0].mxu0
        %917 = vmatprep.mubr.f32.mxu0 0.0
        %918 = vmatmul.mubr.f32.gmra.mrb[0].mxu0 %v770
        %v919 = vpop.f32.mrb[0].mxu0
        %v920 = vadd.f32 0.0, %v919
        %v921 = vpop.f32.mrb[0].mxu0
        %922 = vmatprep.mubr.f32.mxu0 0.0
        %923 = vmatmul.mubr.f32.gmra.mrb[0].mxu0 %v772
        %v924 = vpop.f32.mrb[0].mxu0
        %v925 = vadd.f32 0.0, %v924
        %v926 = vpop.f32.mrb[0].mxu0
        %927 = vmatprep.mubr.f32.mxu0 0.0
        %928 = vmatmul.mubr.f32.gmra.mrb[0].mxu0 %v774
        %v929 = vpop.f32.mrb[0].mxu0
        %v930 = vadd.f32 0.0, %v929
        %v931 = vpop.f32.mrb[0].mxu0
        %932 = vmatprep.mubr.f32.mxu0 0.0
        %933 = vmatmul.mubr.f32.gmra.mrb[0].mxu0 %v776
        %v934 = vpop.f32.mrb[0].mxu0
        %v935 = vadd.f32 0.0, %v934
        %v936 = vpop.f32.mrb[0].mxu0
        %937 = vdwg.mxu0
        %938 = vst.msk [vmem:[%s316] sm:$0xff] %vm375, %v860
        %939 = vst.msk [vmem:[%s316 + $0x8] sm:$0xff] %vm375, %v865
        %940 = vst.msk [vmem:[%s316 + $0x10] sm:$0xff] %vm375, %v870
        %941 = vst.msk [vmem:[%s316 + $0x18] sm:$0xff] %vm375, %v875
        %942 = vst.msk [vmem:[%s316 + $0x20] sm:$0xff] %vm375, %v880
        %943 = vst.msk [vmem:[%s316 + $0x28] sm:$0xff] %vm375, %v885
        %944 = vst.msk [vmem:[%s316 + $0x30] sm:$0xff] %vm375, %v890
        %945 = vst.msk [vmem:[%s316 + $0x38] sm:$0xff] %vm375, %v895
        %946 = vst.msk [vmem:[%s316 + $0x40] sm:$0xff] %vm375, %v900
        %947 = vst.msk [vmem:[%s316 + $0x48] sm:$0xff] %vm375, %v905
        %948 = vst.msk [vmem:[%s316 + $0x50] sm:$0xff] %vm375, %v910
        %949 = vst.msk [vmem:[%s316 + $0x58] sm:$0xff] %vm375, %v915
        %950 = vst.msk [vmem:[%s316 + $0x60] sm:$0xff] %vm375, %v920
        %951 = vst.msk [vmem:[%s316 + $0x68] sm:$0xff] %vm375, %v925
        %952 = vst.msk [vmem:[%s316 + $0x70] sm:$0xff] %vm375, %v930
        %953 = vst.msk [vmem:[%s316 + $0x78] sm:$0xff] %vm375, %v935
        %s954 = sand.u32 %s130, 1
        %s955 = scalar_lea.sflag [#allocation4], %s954
        %s956 = sand.u32 %s130, 1
        %s957 = smul.addr %s956, 128
        %s958 = scalar_lea.vmem [#allocation8], %s957
        %s959 = sand.u32 %s158, 1
        %s960 = scalar_lea.sflag [#allocation10], %s959
        %s961 = sand.u32 %s158, 1
        %s962 = smul.addr %s961, 128
        %s963 = scalar_lea.vmem [#allocation9], %s962
        // Predicated region
        $region45: #{tpu_custom_call.1} parent=31 // pred_check
          %p964 = pneg %p140
        $region46: #{tpu_custom_call.1} parent=31 // pred_check_branch
          %966 = sbr.rel (%p964) target = $region48
        $region47: #{tpu_custom_call.1} parent=31 // pred_region
          %s967 = smul.u32 16, %s33
          %s969 = ssub.s32 2048, 2048
          %970 = vsyncadd %s955, %s969
          %s971 = smul.addr %s32, 16
          %s972 = sadd.s32 %s967, %s971
          %s973 = smul.addr %s972, 128
          %s974 = scalar_lea.hbm %s3, %s973
          %s975 = sshll.u32 %s958, 4
          %s976 = int_to_ptr.vmem [resolvable:$true] %s975
          %981 = dma.vmem_to_hbm [thread:$0]  %s976, 2048, %s974, %s955, 128, 128, 8
        $region48: #{tpu_custom_call.1} parent=31 // pred_fallthru
          _
        // Predicated region
        $region49: #{tpu_custom_call.1} parent=31 // pred_check
          %p982 = pneg %p168
        $region50: #{tpu_custom_call.1} parent=31 // pred_check_branch
          %984 = sbr.rel (%p982) target = $region52
        $region51: #{tpu_custom_call.1} parent=31 // pred_region
          %s985 = smul.u32 16, %s33
          %s987 = ssub.s32 2048, 2048
          %988 = vsyncadd %s960, %s987
          %s989 = smul.addr %s32, 16
          %s990 = sadd.s32 %s985, %s989
          %s991 = smul.addr %s990, 128
          %s992 = scalar_lea.hbm %s4, %s991
          %s993 = sshll.u32 %s963, 4
          %s994 = int_to_ptr.vmem [resolvable:$true] %s993
          %999 = dma.vmem_to_hbm [thread:$0]  %s994, 2048, %s992, %s960, 128, 128, 8
        $region52: #{tpu_custom_call.1} parent=31 // pred_fallthru
          _
      $region32: #{tpu_custom_call.1} parent=5 // pred_fallthru
        _
      %p1000 = scmp.le.s32.totalorder 2, %s23
      // Predicated region
      $region53: #{tpu_custom_call.1} parent=5 // pred_check
        %p1001 = pneg %p1000
      $region54: #{tpu_custom_call.1} parent=5 // pred_check_branch
        %1003 = sbr.rel (%p1001) target = $region56
      $region55: #{tpu_custom_call.1} parent=5 // pred_region
        %s1004 = ssub.s32 %s23, 2
        // Predicated region
        $region57: #{tpu_custom_call.1} parent=55 // pred_check
          %p1005 = pneg %p146
        $region58: #{tpu_custom_call.1} parent=55 // pred_check_branch
          %1007 = sbr.rel (%p1005) target = $region60
        $region59: #{tpu_custom_call.1} parent=55 // pred_region
          %s1008 = sand.u32 %s131, 1
          %s1009 = scalar_lea.sflag [#allocation4], %s1008
          %s1010 = sand.u32 %s131, 1
          %s1011 = smul.addr %s1010, 128
          %s1012 = scalar_lea.vmem [#allocation8], %s1011
          %1013 = dma.done %s1009, 2048
        $region60: #{tpu_custom_call.1} parent=55 // pred_fallthru
          _
        // Predicated region
        $region61: #{tpu_custom_call.1} parent=55 // pred_check
          %p1014 = pneg %p174
        $region62: #{tpu_custom_call.1} parent=55 // pred_check_branch
          %1016 = sbr.rel (%p1014) target = $region64
        $region63: #{tpu_custom_call.1} parent=55 // pred_region
          %s1017 = sand.u32 %s159, 1
          %s1018 = scalar_lea.sflag [#allocation10], %s1017
          %s1019 = sand.u32 %s159, 1
          %s1020 = smul.addr %s1019, 128
          %s1021 = scalar_lea.vmem [#allocation9], %s1020
          %1022 = dma.done %s1018, 2048
        $region64: #{tpu_custom_call.1} parent=55 // pred_fallthru
          _
      $region56: #{tpu_custom_call.1} parent=5 // pred_fallthru
        _
    $region6: #{tpu_custom_call.1} parent=1 // loop_footer
      %s27 = sadd.s32 1, %s23
    $region7: #{tpu_custom_call.1} parent=1 // loop_footer_branch
      %22 = sbr.rel target = $region3
    $region8: #{tpu_custom_call.1} parent=1 // loop_exit
      _
    %1023 = vsyncpa [#allocation3], 1
    %s1024 = scalar_lea.sflag [#allocation3], 1
    %1025 = vsyncpa %s1024, 1
    %1026 = vsyncpa [#allocation6], 1
    %s1027 = scalar_lea.sflag [#allocation6], 1
    %1028 = vsyncpa %s1027, 1
    %1029 = vsyncpa [#allocation4], 1
    %s1030 = scalar_lea.sflag [#allocation4], 1
    %1031 = vsyncpa %s1030, 1
    %1032 = vsyncpa [#allocation10], 1
    %s1033 = scalar_lea.sflag [#allocation10], 1
    %1034 = vsyncpa %s1033, 1

</llo_original>
